<compile_context>
chip_gen: v7x
topology: tpu7x:2x2x1
jax: 0.10.0
libtpu: 0.0.40
codegen_flags: <defaults>
</compile_context>

<pallas_src>
import functools

import jax
import jax.numpy as jnp
import numpy as np
from jax.experimental import pallas as pl
from jax.experimental.pallas import tpu as pltpu


def _round_up(x, m):
    return ((x + m - 1) // m) * m


def _bellman_mlp_kernel(x_ref, w1_ref, w_hid_ref, b_hid_ref, wo_ref, bo_ref,
                        logits_ref, probs_ref):
    """Whole MLP forward for one batch tile, entirely in VMEM.

    x_ref:     (tile_b, d_latent)   compute dtype (bf16 or f32)
    w1_ref:    (d_latent, H)        compute dtype
    w_hid_ref: (2, H, H)            compute dtype ([w2, w3])
    b_hid_ref: (3, 1, H)            f32           ([b1, b2, b3])
    wo_ref:    (1, H)               compute dtype (output weight as a row)
    bo_ref:    (1, 1)               f32
    logits_ref, probs_ref: (1, 1, tile_b)  f32, lane-dense (batch on lanes)
    """
    x = x_ref[...]
    cdt = x.dtype  # MXU input dtype; accumulation is always f32.

    # Layer 1: Linear(d_latent, H) + ReLU  (bias/ReLU in f32 on the VPU).
    h = jnp.dot(x, w1_ref[...], preferred_element_type=jnp.float32)
    h = jnp.maximum(h + b_hid_ref[0], 0.0)

    # Hidden layer 2: Linear(H, H) + ReLU.
    h = jnp.dot(h.astype(cdt), w_hid_ref[0], preferred_element_type=jnp.float32)
    h = jnp.maximum(h + b_hid_ref[1], 0.0)

    # Hidden layer 3: Linear(H, H) + ReLU.
    h = jnp.dot(h.astype(cdt), w_hid_ref[1], preferred_element_type=jnp.float32)
    h = jnp.maximum(h + b_hid_ref[2], 0.0)

    # Output layer: contract the H dims of wo (1,H) and h (tile_b,H) so the result
    # comes out lane-dense as (1, tile_b) -- no (tile_b,1) masked column store.
    logits = jnp.einsum("oh,bh->ob", wo_ref[...], h.astype(cdt),
                        preferred_element_type=jnp.float32)
    logits = logits + bo_ref[...]                      # (1,1) broadcasts to (1,tile_b)

    # Fused sigmoid epilogue (exp runs on the otherwise-idle EUP slot).
    probs = 1.0 / (1.0 + jnp.exp(-logits))

    logits_ref[0] = logits.astype(logits_ref.dtype)
    probs_ref[0] = probs.astype(probs_ref.dtype)


@functools.partial(jax.jit, static_argnames=("tile_b", "compute_dtype"))
def bellman_safeset_forward(x, params, tile_b=None, compute_dtype=jnp.bfloat16):
    """Returns (logits, probs), each (B, 1) float32.

    logits == BellmanSafeSet.forward(x, already_embedded=True)
    probs  == BellmanSafeSet.safe_set_probability(x, already_embedded=True)
    (Pass the target net's params for the `target=True` branch.)
    """
    w1, b1, w2, b2, w3, b3, wo, bo = params
    B, D = x.shape
    H = w1.shape[1]
    cdt = jnp.dtype(compute_dtype)

    # ---- choose the batch tile (all static python ints under jit) ----
    b_pad8 = _round_up(B, 8)
    tb = 512 if tile_b is None else int(tile_b)
    tb = min(_round_up(tb, 8), b_pad8)
    # For reasonably large batches keep at least 2 grid steps so the "parallel"
    # batch axis can be sharded across the 2 TensorCores of a v7x chip.
    if b_pad8 >= 256 and b_pad8 // tb < 2:
        tb = _round_up(pl.cdiv(b_pad8, 2), 8)
    n_tiles = pl.cdiv(b_pad8, tb)
    b_pad = n_tiles * tb

    if b_pad != B:  # ragged batch: zero-pad, slice the result afterwards
        x = jnp.pad(x, ((0, b_pad - B), (0, 0)))

    # ---- pack parameters into few, replicated refs ----
    xc = x.astype(cdt)
    w1c = w1.astype(cdt)
    w_hid = jnp.stack([w2, w3]).astype(cdt)                       # (2, H, H)
    b_hid = jnp.stack([b1.reshape(1, H), b2.reshape(1, H),
                       b3.reshape(1, H)]).astype(jnp.float32)     # (3, 1, H)
    wo_row = wo.reshape(1, H).astype(cdt)                         # (1, H)
    bo11 = bo.reshape(1, 1).astype(jnp.float32)                   # (1, 1)

    logits3, probs3 = pl.pallas_call(
        _bellman_mlp_kernel,
        out_shape=(jax.ShapeDtypeStruct((n_tiles, 1, tb), jnp.float32),
                   jax.ShapeDtypeStruct((n_tiles, 1, tb), jnp.float32)),
        grid_spec=pltpu.PrefetchScalarGridSpec(
            num_scalar_prefetch=0,
            grid=(n_tiles,),
            in_specs=[
                pl.BlockSpec((tb, D), lambda i: (i, 0)),          # x tile
                pl.BlockSpec((D, H), lambda i: (0, 0)),           # w1
                pl.BlockSpec((2, H, H), lambda i: (0, 0, 0)),     # [w2, w3]
                pl.BlockSpec((3, 1, H), lambda i: (0, 0, 0)),     # [b1, b2, b3]
                pl.BlockSpec((1, H), lambda i: (0, 0)),           # wo row
                pl.BlockSpec((1, 1), lambda i: (0, 0)),           # bo
            ],
            out_specs=[
                pl.BlockSpec((1, 1, tb), lambda i: (i, 0, 0)),    # logits (lane-dense)
                pl.BlockSpec((1, 1, tb), lambda i: (i, 0, 0)),    # probs  (lane-dense)
            ],
        ),
        compiler_params=pltpu.CompilerParams(
            dimension_semantics=("parallel",)),
    )(xc, w1c, w_hid, b_hid, wo_row, bo11)

    # Layout plumbing back to the module's (B, 1) convention.
    logits = logits3.reshape(b_pad)[:B].reshape(B, 1)
    probs = probs3.reshape(b_pad)[:B].reshape(B, 1)
    return logits, probs


def init_params(key, d_latent, hidden_size):
    """Synthetic init for GenericNet(d_latent, 1, n_hidden=2, hidden_size)."""
    keys = jax.random.split(key, 8)

    def lin(kw, kb, d_in, d_out):
        bound = 1.0 / np.sqrt(d_in)
        w = jax.random.uniform(kw, (d_in, d_out), jnp.float32, -bound, bound)
        b = jax.random.uniform(kb, (d_out,), jnp.float32, -bound, bound)
        return w, b

    w1, b1 = lin(keys[0], keys[1], d_latent, hidden_size)
    w2, b2 = lin(keys[2], keys[3], hidden_size, hidden_size)
    w3, b3 = lin(keys[4], keys[5], hidden_size, hidden_size)
    wo, bo = lin(keys[6], keys[7], hidden_size, 1)
    return (w1, b1, w2, b2, w3, b3, wo, bo)


def reference_forward(x, params):
    w1, b1, w2, b2, w3, b3, wo, bo = params
    h = jnp.maximum(x @ w1 + b1, 0.0)
    h = jnp.maximum(h @ w2 + b2, 0.0)
    h = jnp.maximum(h @ w3 + b3, 0.0)
    return h @ wo + bo


if __name__ == "__main__":
    # Shapes consistent with the module: cfg.d_latent=32, cfg.bc_hidden_size=32,
    # cfg.bc_n_hidden=2, small batches.
    B, D_LATENT, HIDDEN = 8, 32, 32

    key = jax.random.PRNGKey(0)
    k_x, k_x2, k_p = jax.random.split(key, 3)
    params = init_params(k_p, D_LATENT, HIDDEN)

    # Case 1: small batch, f32 compute (bit-faithful to the torch module).
    x = jax.random.normal(k_x, (B, D_LATENT), jnp.float32)
    logits, probs = bellman_safeset_forward(x, params, compute_dtype=jnp.float32)
    jax.block_until_ready((logits, probs))
    ref = reference_forward(x, params)
    np.testing.assert_allclose(np.asarray(logits), np.asarray(ref),
                               rtol=1e-4, atol=1e-4)
    np.testing.assert_allclose(np.asarray(probs), np.asarray(jax.nn.sigmoid(ref)),
                               rtol=1e-4, atol=1e-4)

    # Case 2: ragged batch (not a multiple of the tile) exercising padding + grid > 1.
    B2 = 20
    x2 = jax.random.normal(k_x2, (B2, D_LATENT), jnp.float32)
    logits2, probs2 = bellman_safeset_forward(x2, params, tile_b=8,
                                              compute_dtype=jnp.float32)
    jax.block_until_ready(logits2)
    ref2 = reference_forward(x2, params)
    np.testing.assert_allclose(np.asarray(logits2), np.asarray(ref2),
                               rtol=1e-4, atol=1e-4)

    # Case 3: default bf16 streaming path (f32 accumulation), loose tolerance.
    logits_bf, probs_bf = bellman_safeset_forward(x, params)
    jax.block_until_ready(logits_bf)
    np.testing.assert_allclose(np.asarray(logits_bf), np.asarray(ref),
                               rtol=5e-2, atol=5e-2)
    np.testing.assert_allclose(np.asarray(probs_bf), np.asarray(jax.nn.sigmoid(ref)),
                               rtol=5e-2, atol=5e-2)

    # TODO(synk): encoder.encode() (already_embedded=False), BCEWithLogitsLoss /
    # Bellman-target update(), Adam step and target-net sync are training-side and
    # not part of this forward kernel.
    print("KERNEL_OK")
</pallas_src>

<mosaic_0001>
module attributes {stable_mosaic.version = 11 : i64} {
  func.func @_bellman_mlp_kernel(%arg0: i32, %arg1: memref<8x32xf32, #tpu.memory_space<vmem>>, %arg2: memref<32x32xf32, #tpu.memory_space<vmem>>, %arg3: memref<2x32x32xf32, #tpu.memory_space<vmem>>, %arg4: memref<3x1x32xf32, #tpu.memory_space<vmem>>, %arg5: memref<1x32xf32, #tpu.memory_space<vmem>>, %arg6: memref<1x1xf32, #tpu.memory_space<vmem>>, %arg7: memref<1x1x8xf32, #tpu.memory_space<vmem>>, %arg8: memref<1x1x8xf32, #tpu.memory_space<vmem>>) attributes {dimension_semantics = [#tpu.dimension_semantics<parallel>], iteration_bounds = array<i64: 1>, scalar_prefetch = 0 : i64, scratch_operands = 0 : i64, tpu.core_type = #tpu.core_type<tc>, window_params = [{transform_indices = @transform_0, window_bounds = array<i64: 8, 32>}, {pipeline_mode = #tpu.pipeline_mode<synchronous>, transform_indices = @transform_1, window_bounds = array<i64: 32, 32>}, {pipeline_mode = #tpu.pipeline_mode<synchronous>, transform_indices = @transform_2, window_bounds = array<i64: 2, 32, 32>}, {pipeline_mode = #tpu.pipeline_mode<synchronous>, transform_indices = @transform_3, window_bounds = array<i64: 3, 1, 32>}, {pipeline_mode = #tpu.pipeline_mode<synchronous>, transform_indices = @transform_4, window_bounds = array<i64: 1, 32>}, {pipeline_mode = #tpu.pipeline_mode<synchronous>, transform_indices = @transform_5, window_bounds = array<i64: 1, 1>}, {transform_indices = @transform_6, window_bounds = array<i64: 1, 1, 8>}, {transform_indices = @transform_7, window_bounds = array<i64: 1, 1, 8>}]} {
    %c0 = arith.constant 0 : index
    %c0_0 = arith.constant 0 : index
    %0 = vector.load %arg1[%c0, %c0_0] : memref<8x32xf32, #tpu.memory_space<vmem>>, vector<8x32xf32>
    %c0_1 = arith.constant 0 : index
    %c0_2 = arith.constant 0 : index
    %1 = vector.load %arg2[%c0_1, %c0_2] : memref<32x32xf32, #tpu.memory_space<vmem>>, vector<32x32xf32>
    %cst = arith.constant dense<0.000000e+00> : vector<8x32xf32>
    %2 = tpu.matmul %0, %1, %cst {dimension_numbers = #tpu.dot_dimension_numbers<[1], [0], [0], [1], [0, 0, 1, 1], [], []>} : vector<8x32xf32>, vector<32x32xf32>, vector<8x32xf32> -> vector<8x32xf32>
    %c0_3 = arith.constant 0 : index
    %c0_4 = arith.constant 0 : index
    %c0_5 = arith.constant 0 : index
    %3 = vector.load %arg4[%c0_3, %c0_4, %c0_5] : memref<3x1x32xf32, #tpu.memory_space<vmem>>, vector<1x1x32xf32>
    %4 = vector.shape_cast %3 : vector<1x1x32xf32> to vector<1x32xf32>
    %5 = vector.broadcast %4 : vector<1x32xf32> to vector<8x32xf32>
    %6 = arith.addf %2, %5 : vector<8x32xf32>
    %cst_6 = arith.constant 0.000000e+00 : f32
    %7 = vector.broadcast %cst_6 : f32 to vector<8x32xf32>
    %8 = arith.maximumf %6, %7 : vector<8x32xf32>
    %c0_7 = arith.constant 0 : index
    %c0_8 = arith.constant 0 : index
    %c0_9 = arith.constant 0 : index
    %9 = vector.load %arg3[%c0_7, %c0_8, %c0_9] : memref<2x32x32xf32, #tpu.memory_space<vmem>>, vector<1x32x32xf32>
    %10 = vector.shape_cast %9 : vector<1x32x32xf32> to vector<32x32xf32>
    %cst_10 = arith.constant dense<0.000000e+00> : vector<8x32xf32>
    %11 = tpu.matmul %8, %10, %cst_10 {dimension_numbers = #tpu.dot_dimension_numbers<[1], [0], [0], [1], [0, 0, 1, 1], [], []>} : vector<8x32xf32>, vector<32x32xf32>, vector<8x32xf32> -> vector<8x32xf32>
    %c1 = arith.constant 1 : index
    %c0_11 = arith.constant 0 : index
    %c0_12 = arith.constant 0 : index
    %12 = vector.load %arg4[%c1, %c0_11, %c0_12] : memref<3x1x32xf32, #tpu.memory_space<vmem>>, vector<1x1x32xf32>
    %13 = vector.shape_cast %12 : vector<1x1x32xf32> to vector<1x32xf32>
    %14 = vector.broadcast %13 : vector<1x32xf32> to vector<8x32xf32>
    %15 = arith.addf %11, %14 : vector<8x32xf32>
    %cst_13 = arith.constant 0.000000e+00 : f32
    %16 = vector.broadcast %cst_13 : f32 to vector<8x32xf32>
    %17 = arith.maximumf %15, %16 : vector<8x32xf32>
    %c1_14 = arith.constant 1 : index
    %c0_15 = arith.constant 0 : index
    %c0_16 = arith.constant 0 : index
    %18 = vector.load %arg3[%c1_14, %c0_15, %c0_16] : memref<2x32x32xf32, #tpu.memory_space<vmem>>, vector<1x32x32xf32>
    %19 = vector.shape_cast %18 : vector<1x32x32xf32> to vector<32x32xf32>
    %cst_17 = arith.constant dense<0.000000e+00> : vector<8x32xf32>
    %20 = tpu.matmul %17, %19, %cst_17 {dimension_numbers = #tpu.dot_dimension_numbers<[1], [0], [0], [1], [0, 0, 1, 1], [], []>} : vector<8x32xf32>, vector<32x32xf32>, vector<8x32xf32> -> vector<8x32xf32>
    %c2 = arith.constant 2 : index
    %c0_18 = arith.constant 0 : index
    %c0_19 = arith.constant 0 : index
    %21 = vector.load %arg4[%c2, %c0_18, %c0_19] : memref<3x1x32xf32, #tpu.memory_space<vmem>>, vector<1x1x32xf32>
    %22 = vector.shape_cast %21 : vector<1x1x32xf32> to vector<1x32xf32>
    %23 = vector.broadcast %22 : vector<1x32xf32> to vector<8x32xf32>
    %24 = arith.addf %20, %23 : vector<8x32xf32>
    %cst_20 = arith.constant 0.000000e+00 : f32
    %25 = vector.broadcast %cst_20 : f32 to vector<8x32xf32>
    %26 = arith.maximumf %24, %25 : vector<8x32xf32>
    %c0_21 = arith.constant 0 : index
    %c0_22 = arith.constant 0 : index
    %27 = vector.load %arg5[%c0_21, %c0_22] : memref<1x32xf32, #tpu.memory_space<vmem>>, vector<1x32xf32>
    "tpu.trace_start"() <{level = 10 : i32, message = "oh,bh->ob"}> : () -> ()
    %cst_23 = arith.constant dense<0.000000e+00> : vector<1x8xf32>
    %28 = tpu.matmul %27, %26, %cst_23 {dimension_numbers = #tpu.dot_dimension_numbers<[1], [1], [0], [0], [0, 0, 1, 0], [], []>} : vector<1x32xf32>, vector<8x32xf32>, vector<1x8xf32> -> vector<1x8xf32>
    "tpu.trace_stop"() : () -> ()
    %c0_24 = arith.constant 0 : index
    %c0_25 = arith.constant 0 : index
    %29 = vector.load %arg6[%c0_24, %c0_25] : memref<1x1xf32, #tpu.memory_space<vmem>>, vector<1x1xf32>
    %30 = vector.broadcast %29 : vector<1x1xf32> to vector<1x8xf32>
    %31 = arith.addf %28, %30 : vector<1x8xf32>
    %cst_26 = arith.constant 0.000000e+00 : f32
    %32 = vector.broadcast %cst_26 : f32 to vector<1x8xf32>
    %33 = arith.subf %32, %31 : vector<1x8xf32>
    %34 = math.exp %33 : vector<1x8xf32>
    %cst_27 = arith.constant 1.000000e+00 : f32
    %35 = vector.broadcast %cst_27 : f32 to vector<1x8xf32>
    %36 = arith.addf %35, %34 : vector<1x8xf32>
    %cst_28 = arith.constant 1.000000e+00 : f32
    %37 = vector.broadcast %cst_28 : f32 to vector<1x8xf32>
    %38 = arith.divf %37, %36 : vector<1x8xf32>
    %c0_29 = arith.constant 0 : index
    %c0_30 = arith.constant 0 : index
    %c0_31 = arith.constant 0 : index
    %39 = vector.load %arg7[%c0_29, %c0_30, %c0_31] : memref<1x1x8xf32, #tpu.memory_space<vmem>>, vector<1x1x8xf32>
    %40 = vector.shape_cast %39 : vector<1x1x8xf32> to vector<1x8xf32>
    %41 = vector.shape_cast %31 : vector<1x8xf32> to vector<1x1x8xf32>
    tpu.vector_store %arg7[%c0_29, %c0_30, %c0_31], %41 {strides = array<i32>} : memref<1x1x8xf32, #tpu.memory_space<vmem>>, vector<1x1x8xf32>,
    %c0_32 = arith.constant 0 : index
    %c0_33 = arith.constant 0 : index
    %c0_34 = arith.constant 0 : index
    %42 = vector.load %arg8[%c0_32, %c0_33, %c0_34] : memref<1x1x8xf32, #tpu.memory_space<vmem>>, vector<1x1x8xf32>
    %43 = vector.shape_cast %42 : vector<1x1x8xf32> to vector<1x8xf32>
    %44 = vector.shape_cast %38 : vector<1x8xf32> to vector<1x1x8xf32>
    tpu.vector_store %arg8[%c0_32, %c0_33, %c0_34], %44 {strides = array<i32>} : memref<1x1x8xf32, #tpu.memory_space<vmem>>, vector<1x1x8xf32>,
    return
  }
  func.func @transform_0(%arg0: i32) -> (i32, i32) {
    %c0_i32 = arith.constant 0 : i32
    %c0_i32_0 = arith.constant 0 : i32
    return %arg0, %c0_i32 : i32, i32
  }
  func.func @transform_1(%arg0: i32) -> (i32, i32) {
    %c0_i32 = arith.constant 0 : i32
    %c0_i32_0 = arith.constant 0 : i32
    %c0_i32_1 = arith.constant 0 : i32
    return %c0_i32, %c0_i32_0 : i32, i32
  }
  func.func @transform_2(%arg0: i32) -> (i32, i32, i32) {
    %c0_i32 = arith.constant 0 : i32
    %c0_i32_0 = arith.constant 0 : i32
    %c0_i32_1 = arith.constant 0 : i32
    %c0_i32_2 = arith.constant 0 : i32
    return %c0_i32, %c0_i32_0, %c0_i32_1 : i32, i32, i32
  }
  func.func @transform_3(%arg0: i32) -> (i32, i32, i32) {
    %c0_i32 = arith.constant 0 : i32
    %c0_i32_0 = arith.constant 0 : i32
    %c0_i32_1 = arith.constant 0 : i32
    %c0_i32_2 = arith.constant 0 : i32
    return %c0_i32, %c0_i32_0, %c0_i32_1 : i32, i32, i32
  }
  func.func @transform_4(%arg0: i32) -> (i32, i32) {
    %c0_i32 = arith.constant 0 : i32
    %c0_i32_0 = arith.constant 0 : i32
    %c0_i32_1 = arith.constant 0 : i32
    return %c0_i32, %c0_i32_0 : i32, i32
  }
  func.func @transform_5(%arg0: i32) -> (i32, i32) {
    %c0_i32 = arith.constant 0 : i32
    %c0_i32_0 = arith.constant 0 : i32
    %c0_i32_1 = arith.constant 0 : i32
    return %c0_i32, %c0_i32_0 : i32, i32
  }
  func.func @transform_6(%arg0: i32) -> (i32, i32, i32) {
    %c0_i32 = arith.constant 0 : i32
    %c0_i32_0 = arith.constant 0 : i32
    %c0_i32_1 = arith.constant 0 : i32
    return %arg0, %c0_i32, %c0_i32_0 : i32, i32, i32
  }
  func.func @transform_7(%arg0: i32) -> (i32, i32, i32) {
    %c0_i32 = arith.constant 0 : i32
    %c0_i32_0 = arith.constant 0 : i32
    %c0_i32_1 = arith.constant 0 : i32
    return %arg0, %c0_i32, %c0_i32_0 : i32, i32, i32
  }
}

</mosaic_0001>

<llo_original>
// kernel: bellman_safeset_forward.1
$region0: #{bellman_safeset_forward.1}
  #allocation0 [shape = 'u32[]', space=smem, size = 0x4, offset = 0x4, fixed_abs, tag = 'smem constant byte address 0x4 - core index']
  #allocation1 [shape = 'u32[144,128]{1,0:T(1,128)}', space=vmem, size = 0x12000, scoped, tag = 'internal scratch']
  #allocation2 [shape = 'f32[1,1]{1,0:T(1,128)S(1)}', space=vmem, size = 0x200, scoped, tag = 'scoped memory for bellman_safeset_forward.1']
  %s0 = inlined_call_operand.vmem [shape: f32[8,32], index: 0, kind: input, shape index: {}]
  %s1 = inlined_call_operand.vmem [shape: f32[32,32], index: 1, kind: input, shape index: {}]
  %s2 = inlined_call_operand.vmem [shape: f32[2,32,32], index: 2, kind: input, shape index: {}]
  %s3 = inlined_call_operand.vmem [shape: f32[3,1,32], index: 3, kind: input, shape index: {}]
  %s4 = inlined_call_operand.vmem [shape: f32[1,32], index: 4, kind: input, shape index: {}]
  %s5 = inlined_call_operand.<no memory space> [shape: f32[1,1], index: 5, kind: input, shape index: {}]
  %s6 = inlined_call_operand.hbm [shape: f32[1,1,8], index: 6, kind: output, shape index: {0}]
  %s7 = inlined_call_operand.hbm [shape: f32[1,1,8], index: 7, kind: output, shape index: {1}]
  %8 = xla_tuple %s6, %s7
  %s9 = sld [smem:[#allocation0]]
  $region42: #{bellman_safeset_forward.1} parent=0
    _
  %s11 = ssub.s32 1, %s9
  %s12 = scalar_select 0, %s11, %s9
  %v13 = vstv %s5
  %14 = vst [vmem:[#allocation2] sm:$0x1] %v13
  $region1: #{bellman_safeset_forward.1} parent=0
    #allocation3 [shape = 'u8[512]{0}', space=vmem, size = 0x400, scoped, tag = 'output window, operand 0, single buffered']
    #allocation4 [shape = 's32[1]{0}', space=sflag, size = 0x4, scoped, tag = 'scoped memory for bellman_safeset_forward.1']
    #allocation5 [shape = 'u8[512]{0}', space=vmem, size = 0x400, scoped, tag = 'output window, operand 1, single buffered']
    #allocation6 [shape = 's32[1]{0}', space=sflag, size = 0x4, scoped, tag = 'scoped memory for bellman_safeset_forward.1']
    %15 = vsyncpa [#allocation4], 0
    %16 = vsyncpa [#allocation6], 0
    // Predicated region
    $region2: #{bellman_safeset_forward.1} parent=1 // pred_check
      _
    $region3: #{bellman_safeset_forward.1} parent=1 // pred_check_branch
      %18 = sbr.rel (0) target = $region5
    $region4: #{bellman_safeset_forward.1} parent=1 // pred_region
      _
    $region5: #{bellman_safeset_forward.1} parent=1 // pred_fallthru
      _
    // Predicated region
    $region6: #{bellman_safeset_forward.1} parent=1 // pred_check
      _
    $region7: #{bellman_safeset_forward.1} parent=1 // pred_check_branch
      %20 = sbr.rel (0) target = $region9
    $region8: #{bellman_safeset_forward.1} parent=1 // pred_region
      _
    $region9: #{bellman_safeset_forward.1} parent=1 // pred_fallthru
      _
    // Predicated region
    $region10: #{bellman_safeset_forward.1} parent=1 // pred_check
      _
    $region11: #{bellman_safeset_forward.1} parent=1 // pred_check_branch
      %22 = sbr.rel (0) target = $region13
    $region12: #{bellman_safeset_forward.1} parent=1 // pred_region
      _
    $region13: #{bellman_safeset_forward.1} parent=1 // pred_fallthru
      _
    // Predicated region
    $region14: #{bellman_safeset_forward.1} parent=1 // pred_check
      _
    $region15: #{bellman_safeset_forward.1} parent=1 // pred_check_branch
      %24 = sbr.rel (0) target = $region17
    $region16: #{bellman_safeset_forward.1} parent=1 // pred_region
      _
    $region17: #{bellman_safeset_forward.1} parent=1 // pred_fallthru
      _
    // Predicated region
    $region18: #{bellman_safeset_forward.1} parent=1 // pred_check
      _
    $region19: #{bellman_safeset_forward.1} parent=1 // pred_check_branch
      %26 = sbr.rel (0) target = $region21
    $region20: #{bellman_safeset_forward.1} parent=1 // pred_region
      _
    $region21: #{bellman_safeset_forward.1} parent=1 // pred_fallthru
      _
    // Predicated region
    $region22: #{bellman_safeset_forward.1} parent=1 // pred_check
      _
    $region23: #{bellman_safeset_forward.1} parent=1 // pred_check_branch
      %28 = sbr.rel (0) target = $region25
    $region24: #{bellman_safeset_forward.1} parent=1 // pred_region
      _
    $region25: #{bellman_safeset_forward.1} parent=1 // pred_fallthru
      _
    %v29 = vld [vmem:[%s0] sm:$0xff]
    %v30 = vld [vmem:[%s1] sm:$0xff]
    %v31 = vld [vmem:[%s1 + $0x8] sm:$0xff]
    %v32 = vld [vmem:[%s1 + $0x10] sm:$0xff]
    %v33 = vld [vmem:[%s1 + $0x18] sm:$0xff]
    %v34 = vld [vmem:[%s3] sm:$0x1]
    %v36 = vlaneseq
    %v37 = vshrl.u32 %v36, 7
    %v38 = vsub.s32 0, %v37
    %v39 = vrot.slane %v34, %v38
    %vm41 = vcmask 261120
    %v43 = vsel %vm41, %v29, 0
    %45 = vmatprep.subr.mxu0 0.0
    %46 = vmatpush1.msra.mxu0 %v30
    %47 = vmatprep.subr.mxu0 0.0
    %48 = vmatpush1.msra.mxu0 %v31
    %49 = vmatprep.subr.mxu0 0.0
    %50 = vmatpush1.msra.mxu0 %v32
    %51 = vmatprep.subr.mxu0 0.0
    %52 = vmatpush1.msra.mxu0 %v33
    %53 = vmatprep.subr.mxu0 0.0
    %54 = vmatpush1.msra.mxu0 0.0
    %55 = vmatprep.subr.mxu0 0.0
    %56 = vmatpush1.msra.mxu0 0.0
    %57 = vmatprep.subr.mxu0 0.0
    %58 = vmatpush1.msra.mxu0 0.0
    %59 = vmatprep.subr.mxu0 0.0
    %60 = vmatpush1.msra.mxu0 0.0
    %61 = vmatprep.subr.mxu0 0.0
    %62 = vmatpush1.msra.mxu0 0.0
    %63 = vmatprep.subr.mxu0 0.0
    %64 = vmatpush1.msra.mxu0 0.0
    %65 = vmatprep.subr.mxu0 0.0
    %66 = vmatpush1.msra.mxu0 0.0
    %67 = vmatprep.subr.mxu0 0.0
    %68 = vmatpush1.msra.mxu0 0.0
    %69 = vmatprep.subr.mxu0 0.0
    %70 = vmatpush1.msra.mxu0 0.0
    %71 = vmatprep.subr.mxu0 0.0
    %72 = vmatpush1.msra.mxu0 0.0
    %73 = vmatprep.subr.mxu0 0.0
    %74 = vmatpush1.msra.mxu0 0.0
    %75 = vmatprep.subr.mxu0 0.0
    %76 = vmatpush1.msra.mxu0 0.0
    %77 = vmatprep.subr.mxu0 0.0
    %78 = vmatpush1.msra.mxu0 0.0
    %79 = vmatprep.subr.mxu0 0.0
    %80 = vmatpush1.msra.mxu0 0.0
    %81 = vmatprep.subr.mxu0 0.0
    %82 = vmatpush1.msra.mxu0 0.0
    %83 = vmatprep.subr.mxu0 0.0
    %84 = vmatpush1.msra.mxu0 0.0
    %85 = vmatprep.subr.mxu0 0.0
    %86 = vmatpush1.msra.mxu0 0.0
    %87 = vmatprep.subr.mxu0 0.0
    %88 = vmatpush1.msra.mxu0 0.0
    %89 = vmatprep.subr.mxu0 0.0
    %90 = vmatpush1.msra.mxu0 0.0
    %91 = vmatprep.subr.mxu0 0.0
    %92 = vmatpush1.msra.mxu0 0.0
    %93 = vmatprep.subr.mxu0 0.0
    %94 = vmatpush1.msra.mxu0 0.0
    %95 = vmatprep.subr.mxu0 0.0
    %96 = vmatpush1.msra.mxu0 0.0
    %97 = vmatprep.subr.mxu0 0.0
    %98 = vmatpush1.msra.mxu0 0.0
    %99 = vmatprep.subr.mxu0 0.0
    %100 = vmatpush1.msra.mxu0 0.0
    %101 = vmatprep.subr.mxu0 0.0
    %102 = vmatpush1.msra.mxu0 0.0
    %103 = vmatprep.subr.mxu0 0.0
    %104 = vmatpush1.msra.mxu0 0.0
    %105 = vmatprep.subr.mxu0 0.0
    %106 = vmatpush1.msra.mxu0 0.0
    %107 = vmatprep.subr.mxu0 0.0
    %108 = vmatpush1.msra.mxu0 0.0
    %109 = vmatprep.mubr.f32.mxu0 0.0
    %110 = vmatmul.mubr.f32.gmra.mrb[0].mxu0 %v43
    %v111 = vpop.f32.mrb[0].mxu0
    %v112 = vadd.f32 %v39, %v111
    %v113 = vpop.f32.mrb[0].mxu0
    %114 = vdwg.mxu0
    %v115 = vmax.f32 %v112, 0.0
    %v116 = vld [vmem:[%s2] sm:$0xff]
    %v117 = vld [vmem:[%s2 + $0x8] sm:$0xff]
    %v118 = vld [vmem:[%s2 + $0x10] sm:$0xff]
    %v119 = vld [vmem:[%s2 + $0x18] sm:$0xff]
    %s120 = scalar_lea.vmem %s3, 1
    %v121 = vld [vmem:[%s120] sm:$0x1]
    %v123 = vlaneseq
    %v124 = vshrl.u32 %v123, 7
    %v125 = vsub.s32 0, %v124
    %v126 = vrot.slane %v121, %v125
    %v129 = vsel %vm41, %v115, 0
    %131 = vmatprep.subr.mxu0 0.0
    %132 = vmatpush1.msra.mxu0 %v116
    %133 = vmatprep.subr.mxu0 0.0
    %134 = vmatpush1.msra.mxu0 %v117
    %135 = vmatprep.subr.mxu0 0.0
    %136 = vmatpush1.msra.mxu0 %v118
    %137 = vmatprep.subr.mxu0 0.0
    %138 = vmatpush1.msra.mxu0 %v119
    %139 = vmatprep.subr.mxu0 0.0
    %140 = vmatpush1.msra.mxu0 0.0
    %141 = vmatprep.subr.mxu0 0.0
    %142 = vmatpush1.msra.mxu0 0.0
    %143 = vmatprep.subr.mxu0 0.0
    %144 = vmatpush1.msra.mxu0 0.0
    %145 = vmatprep.subr.mxu0 0.0
    %146 = vmatpush1.msra.mxu0 0.0
    %147 = vmatprep.subr.mxu0 0.0
    %148 = vmatpush1.msra.mxu0 0.0
    %149 = vmatprep.subr.mxu0 0.0
    %150 = vmatpush1.msra.mxu0 0.0
    %151 = vmatprep.subr.mxu0 0.0
    %152 = vmatpush1.msra.mxu0 0.0
    %153 = vmatprep.subr.mxu0 0.0
    %154 = vmatpush1.msra.mxu0 0.0
    %155 = vmatprep.subr.mxu0 0.0
    %156 = vmatpush1.msra.mxu0 0.0
    %157 = vmatprep.subr.mxu0 0.0
    %158 = vmatpush1.msra.mxu0 0.0
    %159 = vmatprep.subr.mxu0 0.0
    %160 = vmatpush1.msra.mxu0 0.0
    %161 = vmatprep.subr.mxu0 0.0
    %162 = vmatpush1.msra.mxu0 0.0
    %163 = vmatprep.subr.mxu0 0.0
    %164 = vmatpush1.msra.mxu0 0.0
    %165 = vmatprep.subr.mxu0 0.0
    %166 = vmatpush1.msra.mxu0 0.0
    %167 = vmatprep.subr.mxu0 0.0
    %168 = vmatpush1.msra.mxu0 0.0
    %169 = vmatprep.subr.mxu0 0.0
    %170 = vmatpush1.msra.mxu0 0.0
    %171 = vmatprep.subr.mxu0 0.0
    %172 = vmatpush1.msra.mxu0 0.0
    %173 = vmatprep.subr.mxu0 0.0
    %174 = vmatpush1.msra.mxu0 0.0
    %175 = vmatprep.subr.mxu0 0.0
    %176 = vmatpush1.msra.mxu0 0.0
    %177 = vmatprep.subr.mxu0 0.0
    %178 = vmatpush1.msra.mxu0 0.0
    %179 = vmatprep.subr.mxu0 0.0
    %180 = vmatpush1.msra.mxu0 0.0
    %181 = vmatprep.subr.mxu0 0.0
    %182 = vmatpush1.msra.mxu0 0.0
    %183 = vmatprep.subr.mxu0 0.0
    %184 = vmatpush1.msra.mxu0 0.0
    %185 = vmatprep.subr.mxu0 0.0
    %186 = vmatpush1.msra.mxu0 0.0
    %187 = vmatprep.subr.mxu0 0.0
    %188 = vmatpush1.msra.mxu0 0.0
    %189 = vmatprep.subr.mxu0 0.0
    %190 = vmatpush1.msra.mxu0 0.0
    %191 = vmatprep.subr.mxu0 0.0
    %192 = vmatpush1.msra.mxu0 0.0
    %193 = vmatprep.subr.mxu0 0.0
    %194 = vmatpush1.msra.mxu0 0.0
    %195 = vmatprep.mubr.f32.mxu0 0.0
    %196 = vmatmul.mubr.f32.gmra.mrb[0].mxu0 %v129
    %v197 = vpop.f32.mrb[0].mxu0
    %v198 = vadd.f32 %v126, %v197
    %v199 = vpop.f32.mrb[0].mxu0
    %200 = vdwg.mxu0
    %v201 = vmax.f32 %v198, 0.0
    %s202 = scalar_lea.vmem %s2, 32
    %v203 = vld [vmem:[%s202] sm:$0xff]
    %v204 = vld [vmem:[%s202 + $0x8] sm:$0xff]
    %v205 = vld [vmem:[%s202 + $0x10] sm:$0xff]
    %v206 = vld [vmem:[%s202 + $0x18] sm:$0xff]
    %s207 = scalar_lea.vmem %s3, 2
    %v208 = vld [vmem:[%s207] sm:$0x1]
    %v210 = vlaneseq
    %v211 = vshrl.u32 %v210, 7
    %v212 = vsub.s32 0, %v211
    %v213 = vrot.slane %v208, %v212
    %v216 = vsel %vm41, %v201, 0
    %218 = vmatprep.subr.mxu0 0.0
    %219 = vmatpush1.msra.mxu0 %v203
    %220 = vmatprep.subr.mxu0 0.0
    %221 = vmatpush1.msra.mxu0 %v204
    %222 = vmatprep.subr.mxu0 0.0
    %223 = vmatpush1.msra.mxu0 %v205
    %224 = vmatprep.subr.mxu0 0.0
    %225 = vmatpush1.msra.mxu0 %v206
    %226 = vmatprep.subr.mxu0 0.0
    %227 = vmatpush1.msra.mxu0 0.0
    %228 = vmatprep.subr.mxu0 0.0
    %229 = vmatpush1.msra.mxu0 0.0
    %230 = vmatprep.subr.mxu0 0.0
    %231 = vmatpush1.msra.mxu0 0.0
    %232 = vmatprep.subr.mxu0 0.0
    %233 = vmatpush1.msra.mxu0 0.0
    %234 = vmatprep.subr.mxu0 0.0
    %235 = vmatpush1.msra.mxu0 0.0
    %236 = vmatprep.subr.mxu0 0.0
    %237 = vmatpush1.msra.mxu0 0.0
    %238 = vmatprep.subr.mxu0 0.0
    %239 = vmatpush1.msra.mxu0 0.0
    %240 = vmatprep.subr.mxu0 0.0
    %241 = vmatpush1.msra.mxu0 0.0
    %242 = vmatprep.subr.mxu0 0.0
    %243 = vmatpush1.msra.mxu0 0.0
    %244 = vmatprep.subr.mxu0 0.0
    %245 = vmatpush1.msra.mxu0 0.0
    %246 = vmatprep.subr.mxu0 0.0
    %247 = vmatpush1.msra.mxu0 0.0
    %248 = vmatprep.subr.mxu0 0.0
    %249 = vmatpush1.msra.mxu0 0.0
    %250 = vmatprep.subr.mxu0 0.0
    %251 = vmatpush1.msra.mxu0 0.0
    %252 = vmatprep.subr.mxu0 0.0
    %253 = vmatpush1.msra.mxu0 0.0
    %254 = vmatprep.subr.mxu0 0.0
    %255 = vmatpush1.msra.mxu0 0.0
    %256 = vmatprep.subr.mxu0 0.0
    %257 = vmatpush1.msra.mxu0 0.0
    %258 = vmatprep.subr.mxu0 0.0
    %259 = vmatpush1.msra.mxu0 0.0
    %260 = vmatprep.subr.mxu0 0.0
    %261 = vmatpush1.msra.mxu0 0.0
    %262 = vmatprep.subr.mxu0 0.0
    %263 = vmatpush1.msra.mxu0 0.0
    %264 = vmatprep.subr.mxu0 0.0
    %265 = vmatpush1.msra.mxu0 0.0
    %266 = vmatprep.subr.mxu0 0.0
    %267 = vmatpush1.msra.mxu0 0.0
    %268 = vmatprep.subr.mxu0 0.0
    %269 = vmatpush1.msra.mxu0 0.0
    %270 = vmatprep.subr.mxu0 0.0
    %271 = vmatpush1.msra.mxu0 0.0
    %272 = vmatprep.subr.mxu0 0.0
    %273 = vmatpush1.msra.mxu0 0.0
    %274 = vmatprep.subr.mxu0 0.0
    %275 = vmatpush1.msra.mxu0 0.0
    %276 = vmatprep.subr.mxu0 0.0
    %277 = vmatpush1.msra.mxu0 0.0
    %278 = vmatprep.subr.mxu0 0.0
    %279 = vmatpush1.msra.mxu0 0.0
    %280 = vmatprep.subr.mxu0 0.0
    %281 = vmatpush1.msra.mxu0 0.0
    %282 = vmatprep.mubr.f32.mxu0 0.0
    %283 = vmatmul.mubr.f32.gmra.mrb[0].mxu0 %v216
    %v284 = vpop.f32.mrb[0].mxu0
    %v285 = vadd.f32 %v213, %v284
    %v286 = vpop.f32.mrb[0].mxu0
    %287 = vdwg.mxu0
    %v288 = vmax.f32 %v285, 0.0
    %v289 = vld [vmem:[%s4] sm:$0x1]
    %v290 = vld [vmem:[#allocation2] sm:$0x1]
    %292 = vset.pattern.permute.xlu0 0
    %293 = vperm.xlu0 %292, %v290
    %v294 = vpop.permute.xlu0 %293
    %v296 = vlaneseq
    %v297 = vshrl.u32 %v296, 7
    %v298 = vsub.s32 0, %v297
    %v299 = vrot.slane %v294, %v298
    %v301 = vsel %vm41, %v289, 0
    %v304 = vsel %vm41, %v288, 0
    %306 = vmatprep.subr.mxu0 0.0
    %307 = vmatpush1.xpose.msra.mxu0 %v304
    %308 = vmatprep.subr.mxu0 0.0
    %309 = vmatpush1.xpose.msra.mxu0 0.0
    %310 = vmatprep.subr.mxu0 0.0
    %311 = vmatpush1.xpose.msra.mxu0 0.0
    %312 = vmatprep.subr.mxu0 0.0
    %313 = vmatpush1.xpose.msra.mxu0 0.0
    %314 = vmatprep.subr.mxu0 0.0
    %315 = vmatpush1.xpose.msra.mxu0 0.0
    %316 = vmatprep.subr.mxu0 0.0
    %317 = vmatpush1.xpose.msra.mxu0 0.0
    %318 = vmatprep.subr.mxu0 0.0
    %319 = vmatpush1.xpose.msra.mxu0 0.0
    %320 = vmatprep.subr.mxu0 0.0
    %321 = vmatpush1.xpose.msra.mxu0 0.0
    %322 = vmatprep.subr.mxu0 0.0
    %323 = vmatpush1.xpose.msra.mxu0 0.0
    %324 = vmatprep.subr.mxu0 0.0
    %325 = vmatpush1.xpose.msra.mxu0 0.0
    %326 = vmatprep.subr.mxu0 0.0
    %327 = vmatpush1.xpose.msra.mxu0 0.0
    %328 = vmatprep.subr.mxu0 0.0
    %329 = vmatpush1.xpose.msra.mxu0 0.0
    %330 = vmatprep.subr.mxu0 0.0
    %331 = vmatpush1.xpose.msra.mxu0 0.0
    %332 = vmatprep.subr.mxu0 0.0
    %333 = vmatpush1.xpose.msra.mxu0 0.0
    %334 = vmatprep.subr.mxu0 0.0
    %335 = vmatpush1.xpose.msra.mxu0 0.0
    %336 = vmatprep.subr.mxu0 0.0
    %337 = vmatpush1.xpose.msra.mxu0 0.0
    %338 = vmatprep.subr.mxu0 0.0
    %339 = vmatpush1.xpose.msra.mxu0 0.0
    %340 = vmatprep.subr.mxu0 0.0
    %341 = vmatpush1.xpose.msra.mxu0 0.0
    %342 = vmatprep.subr.mxu0 0.0
    %343 = vmatpush1.xpose.msra.mxu0 0.0
    %344 = vmatprep.subr.mxu0 0.0
    %345 = vmatpush1.xpose.msra.mxu0 0.0
    %346 = vmatprep.subr.mxu0 0.0
    %347 = vmatpush1.xpose.msra.mxu0 0.0
    %348 = vmatprep.subr.mxu0 0.0
    %349 = vmatpush1.xpose.msra.mxu0 0.0
    %350 = vmatprep.subr.mxu0 0.0
    %351 = vmatpush1.xpose.msra.mxu0 0.0
    %352 = vmatprep.subr.mxu0 0.0
    %353 = vmatpush1.xpose.msra.mxu0 0.0
    %354 = vmatprep.subr.mxu0 0.0
    %355 = vmatpush1.xpose.msra.mxu0 0.0
    %356 = vmatprep.subr.mxu0 0.0
    %357 = vmatpush1.xpose.msra.mxu0 0.0
    %358 = vmatprep.subr.mxu0 0.0
    %359 = vmatpush1.xpose.msra.mxu0 0.0
    %360 = vmatprep.subr.mxu0 0.0
    %361 = vmatpush1.xpose.msra.mxu0 0.0
    %362 = vmatprep.subr.mxu0 0.0
    %363 = vmatpush1.xpose.msra.mxu0 0.0
    %364 = vmatprep.subr.mxu0 0.0
    %365 = vmatpush1.xpose.msra.mxu0 0.0
    %366 = vmatprep.subr.mxu0 0.0
    %367 = vmatpush1.xpose.msra.mxu0 0.0
    %368 = vmatprep.subr.mxu0 0.0
    %369 = vmatpush1.xpose.msra.mxu0 0.0
    %370 = vmatprep.mubr.f32.mxu0 0.0
    %371 = vmatmul.mubr.f32.gmra.mrb[0].mxu0 %v301
    %v372 = vpop.f32.mrb[0].mxu0
    %v373 = vadd.f32 %v299, %v372
    %v374 = vpop.f32.mrb[0].mxu0
    %375 = vdwg.mxu0
    %v376 = vsub.f32 0.0, %v373
    %v377 = vmul.f32 %v376, 1.442695
    %v378 = vpow.pop %v377
    %v379 = vadd.f32 %v378, 1.0
    %v380 = vrcp.pop %v379
    %v381 = vmul.f32 1.0, %v380
    %vm382 = vcmask 57344
    %383 = vst.msk [vmem:[#allocation3] sm:$0x1] %vm382, %v373
    %384 = vst.msk [vmem:[#allocation5] sm:$0x1] %vm382, %v381
    // Predicated region
    $region26: #{bellman_safeset_forward.1} parent=1 // pred_check
      _
    $region27: #{bellman_safeset_forward.1} parent=1 // pred_check_branch
      %386 = sbr.rel (0) target = $region29
    $region28: #{bellman_safeset_forward.1} parent=1 // pred_region
      %s388 = ssub.s32 16, 16
      %389 = vsyncadd [#allocation4], %s388
      %s391 = sshll.u32 [#allocation3], 4
      %s392 = int_to_ptr.vmem [resolvable:$true] %s391
      %394 = dma.vmem_to_hbm [thread:$0]  %s392, 16, %s6, [#allocation4]
    $region29: #{bellman_safeset_forward.1} parent=1 // pred_fallthru
      _
    // Predicated region
    $region30: #{bellman_safeset_forward.1} parent=1 // pred_check
      _
    $region31: #{bellman_safeset_forward.1} parent=1 // pred_check_branch
      %396 = sbr.rel (0) target = $region33
    $region32: #{bellman_safeset_forward.1} parent=1 // pred_region
      %s398 = ssub.s32 16, 16
      %399 = vsyncadd [#allocation6], %s398
      %s401 = sshll.u32 [#allocation5], 4
      %s402 = int_to_ptr.vmem [resolvable:$true] %s401
      %404 = dma.vmem_to_hbm [thread:$0]  %s402, 16, %s7, [#allocation6]
    $region33: #{bellman_safeset_forward.1} parent=1 // pred_fallthru
      _
    // Predicated region
    $region34: #{bellman_safeset_forward.1} parent=1 // pred_check
      _
    $region35: #{bellman_safeset_forward.1} parent=1 // pred_check_branch
      %406 = sbr.rel (0) target = $region37
    $region36: #{bellman_safeset_forward.1} parent=1 // pred_region
      %407 = dma.done [#allocation4], 16
    $region37: #{bellman_safeset_forward.1} parent=1 // pred_fallthru
      _
    // Predicated region
    $region38: #{bellman_safeset_forward.1} parent=1 // pred_check
      _
    $region39: #{bellman_safeset_forward.1} parent=1 // pred_check_branch
      %409 = sbr.rel (0) target = $region41
    $region40: #{bellman_safeset_forward.1} parent=1 // pred_region
      %410 = dma.done [#allocation6], 16
    $region41: #{bellman_safeset_forward.1} parent=1 // pred_fallthru
      _
    %411 = vsyncpa [#allocation4], 1
    %412 = vsyncpa [#allocation6], 1

</llo_original>
